<compile_context>
chip_gen: v5e
topology: v5e:2x2
jax: 0.10.0
libtpu: 0.0.40
codegen_flags: <defaults>
</compile_context>

<pallas_src>
import jax
import jax.numpy as jnp
from jax.experimental import pallas as pl
from jax.experimental.pallas import tpu as pltpu

LANE = 128


def _round_up(n, m):
    return ((n + m - 1) // m) * m


def mlp_kernel(x_ref, w1_ref, b1_ref, w2_ref, b2_ref, w3_ref, b3_ref, o_ref):
    # In-kernel f32 -> bf16 cast (saves a separate XLA cast pass over x).
    x_bf = x_ref[...].astype(jnp.bfloat16)
    # fc1 + relu : (tb,784)bf16 @ (784,128)bf16 -> f32
    h1 = jnp.dot(x_bf, w1_ref[...], preferred_element_type=jnp.float32)
    h1 = jnp.maximum(h1 + b1_ref[...], 0.0)
    # fc2 + tanh : out dim padded 32 -> 128 (zero cols/bias => padded lanes stay 0)
    h2 = jnp.dot(h1.astype(jnp.bfloat16), w2_ref[...],
                 preferred_element_type=jnp.float32)
    h2 = jnp.tanh(h2 + b2_ref[...])
    # fc3 (logits) : in dim padded 32 -> 128 (zero rows), out dim 10 -> 128
    h3 = jnp.dot(h2.astype(jnp.bfloat16), w3_ref[...],
                 preferred_element_type=jnp.float32)
    o_ref[...] = (h3 + b3_ref[...]).astype(o_ref.dtype)


def init_params(key):
    """Deterministic synthetic parameters matching nn.Linear shapes.
    Stored as (in, out) = PyTorch weight.T ; biases as (1, out), float32."""
    ks = jax.random.split(key, 6)

    def lin(kw, kb, fan_in, fan_out):
        bound = 1.0 / jnp.sqrt(fan_in)
        w = jax.random.uniform(kw, (fan_in, fan_out), jnp.float32, -bound, bound)
        b = jax.random.uniform(kb, (1, fan_out), jnp.float32, -bound, bound)
        return w, b

    w1, b1 = lin(ks[0], ks[1], 28 * 28, 128)
    w2, b2 = lin(ks[2], ks[3], 128, 32)
    w3, b3 = lin(ks[4], ks[5], 32, 10)
    return (w1, b1, w2, b2, w3, b3)


def prepare_params(params):
    """One-time prep: pad narrow dims to 128 lanes, cast weights to bf16.
    Zero padding keeps the math exact (padded h2 lanes = tanh(0) = 0, padded
    w3 rows/cols are 0, and the output is sliced back to 10 columns)."""
    w1, b1, w2, b2, w3, b3 = params
    w2p = jnp.zeros((128, LANE), jnp.float32).at[:, :32].set(w2)
    b2p = jnp.zeros((1, LANE), jnp.float32).at[:, :32].set(b2)
    w3p = jnp.zeros((LANE, LANE), jnp.float32).at[:32, :10].set(w3)
    b3p = jnp.zeros((1, LANE), jnp.float32).at[:, :10].set(b3)
    return (w1.astype(jnp.bfloat16), b1,
            w2p.astype(jnp.bfloat16), b2p,
            w3p.astype(jnp.bfloat16), b3p)


def net_forward(x, prepared, *, tile_b=1024, out_dtype=jnp.bfloat16):
    """x: (B,1,28,28) or (B,784) float32. Returns (B,10) float32 logits.

    out_dtype controls the on-HBM output slab; bf16 halves the writeback and
    the final slice read (logits become bf16-precision)."""
    w1, b1, w2, b2, w3, b3 = prepared
    # Same as torch .view(-1, 784); x stays f32 — cast to bf16 happens in-kernel.
    x2 = x.reshape(-1, 28 * 28).astype(jnp.float32)
    B = x2.shape[0]

    # bf16-friendly tile rounding (16 sublanes per bf16 vreg) and a cap at
    # ceil(B/2) so the parallel grid has >= 2 steps (v7x megacore) whenever
    # the batch is big enough; tiny batches just shrink the tile.
    tb = min(tile_b, max(16, _round_up((B + 1) // 2, 16)))
    B_pad = _round_up(B, tb)
    if B_pad != B:
        x2 = jnp.pad(x2, ((0, B_pad - B), (0, 0)))
    grid = (B_pad // tb,)

    # Grid-invariant weights/biases: full-array blocks, constant index_map
    # (Pallas fetches them once and keeps them resident).
    w_spec = lambda shape: pl.BlockSpec(shape, lambda i: (0, 0))

    cost = pl.CostEstimate(
        flops=2 * B_pad * (784 * 128 + 128 * LANE + LANE * LANE),
        transcendentals=B_pad * LANE,
        bytes_accessed=int(
            x2.size * x2.dtype.itemsize
            + sum(int(p.size) * p.dtype.itemsize for p in (w1, b1, w2, b2, w3, b3))
            + B_pad * LANE * jnp.dtype(out_dtype).itemsize
        ),
    )

    out = pl.pallas_call(
        mlp_kernel,
        out_shape=jax.ShapeDtypeStruct((B_pad, LANE), out_dtype),
        grid_spec=pltpu.PrefetchScalarGridSpec(
            num_scalar_prefetch=0,
            grid=grid,
            in_specs=[
                pl.BlockSpec((tb, 784), lambda i: (i, 0)),   # x tile (f32, streamed)
                w_spec((784, 128)),   # w1 (bf16)
                w_spec((1, 128)),     # b1 (f32)
                w_spec((128, LANE)),  # w2 padded (bf16)
                w_spec((1, LANE)),    # b2 padded (f32)
                w_spec((LANE, LANE)), # w3 padded (bf16)
                w_spec((1, LANE)),    # b3 padded (f32)
            ],
            out_specs=pl.BlockSpec((tb, LANE), lambda i: (i, 0)),
        ),
        compiler_params=pltpu.CompilerParams(
            dimension_semantics=("parallel",),
            vmem_limit_bytes=32 * 1024 * 1024,
        ),
        cost_estimate=cost,
    )(x2, w1, b1, w2, b2, w3, b3)

    # Slice back to the true logits; cast the tiny (B,10) result to f32 for a
    # float32-dtype API (values are out_dtype-precision).
    return out[:B, :10].astype(jnp.float32)


def net_reference(x, params):
    """Pure-JAX f32 reference (matches the PyTorch module exactly)."""
    w1, b1, w2, b2, w3, b3 = params
    x2 = x.reshape(-1, 28 * 28)
    h1 = jnp.maximum(x2 @ w1 + b1, 0.0)
    h2 = jnp.tanh(h1 @ w2 + b2)
    return h2 @ w3 + b3


def net_reference_bf16(x, params):
    """Reference with the same bf16-input / f32-accumulate numerics as the kernel."""
    w1, b1, w2, b2, w3, b3 = params
    bf = jnp.bfloat16
    x2 = x.reshape(-1, 28 * 28).astype(bf)
    h1 = jnp.maximum(
        jnp.dot(x2, w1.astype(bf), preferred_element_type=jnp.float32) + b1, 0.0)
    h2 = jnp.tanh(
        jnp.dot(h1.astype(bf), w2.astype(bf), preferred_element_type=jnp.float32) + b2)
    return jnp.dot(h2.astype(bf), w3.astype(bf),
                   preferred_element_type=jnp.float32) + b3


if __name__ == "__main__":
    key = jax.random.PRNGKey(0)
    k_x, k_p = jax.random.split(key)
    params = init_params(k_p)
    prepared = prepare_params(params)

    # Small MNIST-shaped batch (default bf16 output slab).
    B = 8
    x = jax.random.normal(k_x, (B, 1, 28, 28), jnp.float32)
    out = jax.block_until_ready(net_forward(x, prepared))
    assert out.shape == (B, 10), out.shape
    assert jnp.allclose(out, net_reference_bf16(x, params), atol=5e-3, rtol=5e-3), \
        "mismatch vs bf16 reference"
    assert jnp.allclose(out, net_reference(x, params), atol=3e-2, rtol=3e-2), \
        "mismatch vs f32 reference"

    # Ragged batch exercises the zero-padding path (B not a multiple of 16).
    B2 = 10
    x2 = jax.random.normal(jax.random.PRNGKey(1), (B2, 1, 28, 28), jnp.float32)
    out2 = jax.block_until_ready(net_forward(x2, prepared))
    assert out2.shape == (B2, 10), out2.shape
    assert jnp.allclose(out2, net_reference_bf16(x2, params), atol=5e-3, rtol=5e-3), \
        "ragged-batch mismatch vs bf16 reference"

    # Slightly larger batch exercises the multi-step (>=2) parallel grid and
    # the f32-output option.
    B3 = 40
    x3 = jax.random.normal(jax.random.PRNGKey(2), (B3, 1, 28, 28), jnp.float32)
    out3 = jax.block_until_ready(net_forward(x3, prepared, out_dtype=jnp.float32))
    assert out3.shape == (B3, 10), out3.shape
    assert jnp.allclose(out3, net_reference_bf16(x3, params), atol=1e-3, rtol=1e-3), \
        "multi-tile mismatch vs bf16 reference"

    print("KERNEL_OK")
</pallas_src>

<mosaic_0001>
module attributes {stable_mosaic.version = 11 : i64} {
  func.func @mlp_kernel(%arg0: i32, %arg1: memref<16x784xf32, #tpu.memory_space<vmem>>, %arg2: memref<784x128xbf16, #tpu.memory_space<vmem>>, %arg3: memref<1x128xf32, #tpu.memory_space<vmem>>, %arg4: memref<128x128xbf16, #tpu.memory_space<vmem>>, %arg5: memref<1x128xf32, #tpu.memory_space<vmem>>, %arg6: memref<128x128xbf16, #tpu.memory_space<vmem>>, %arg7: memref<1x128xf32, #tpu.memory_space<vmem>>, %arg8: memref<16x128xbf16, #tpu.memory_space<vmem>>) attributes {dimension_semantics = [#tpu.dimension_semantics<parallel>], iteration_bounds = array<i64: 1>, scalar_prefetch = 0 : i64, scratch_operands = 0 : i64, tpu.core_type = #tpu.core_type<tc>, window_params = [{transform_indices = @transform_0, window_bounds = array<i64: 16, 784>}, {pipeline_mode = #tpu.pipeline_mode<synchronous>, transform_indices = @transform_1, window_bounds = array<i64: 784, 128>}, {pipeline_mode = #tpu.pipeline_mode<synchronous>, transform_indices = @transform_2, window_bounds = array<i64: 1, 128>}, {pipeline_mode = #tpu.pipeline_mode<synchronous>, transform_indices = @transform_3, window_bounds = array<i64: 128, 128>}, {pipeline_mode = #tpu.pipeline_mode<synchronous>, transform_indices = @transform_4, window_bounds = array<i64: 1, 128>}, {pipeline_mode = #tpu.pipeline_mode<synchronous>, transform_indices = @transform_5, window_bounds = array<i64: 128, 128>}, {pipeline_mode = #tpu.pipeline_mode<synchronous>, transform_indices = @transform_6, window_bounds = array<i64: 1, 128>}, {transform_indices = @transform_7, window_bounds = array<i64: 16, 128>}]} {
    %c0 = arith.constant 0 : index
    %c0_0 = arith.constant 0 : index
    %0 = vector.load %arg1[%c0, %c0_0] : memref<16x784xf32, #tpu.memory_space<vmem>>, vector<16x784xf32>
    %1 = arith.truncf %0 : vector<16x784xf32> to vector<16x784xbf16>
    %c0_1 = arith.constant 0 : index
    %c0_2 = arith.constant 0 : index
    %2 = vector.load %arg2[%c0_1, %c0_2] : memref<784x128xbf16, #tpu.memory_space<vmem>>, vector<784x128xbf16>
    %cst = arith.constant dense<0.000000e+00> : vector<16x128xf32>
    %3 = tpu.matmul %1, %2, %cst {dimension_numbers = #tpu.dot_dimension_numbers<[1], [0], [0], [1], [0, 0, 1, 1], [], []>} : vector<16x784xbf16>, vector<784x128xbf16>, vector<16x128xf32> -> vector<16x128xf32>
    %c0_3 = arith.constant 0 : index
    %c0_4 = arith.constant 0 : index
    %4 = vector.load %arg3[%c0_3, %c0_4] : memref<1x128xf32, #tpu.memory_space<vmem>>, vector<1x128xf32>
    %5 = vector.broadcast %4 : vector<1x128xf32> to vector<16x128xf32>
    %6 = arith.addf %3, %5 : vector<16x128xf32>
    %cst_5 = arith.constant 0.000000e+00 : f32
    %7 = vector.broadcast %cst_5 : f32 to vector<16x128xf32>
    %8 = arith.maximumf %6, %7 : vector<16x128xf32>
    %9 = arith.truncf %8 : vector<16x128xf32> to vector<16x128xbf16>
    %c0_6 = arith.constant 0 : index
    %c0_7 = arith.constant 0 : index
    %10 = vector.load %arg4[%c0_6, %c0_7] : memref<128x128xbf16, #tpu.memory_space<vmem>>, vector<128x128xbf16>
    %cst_8 = arith.constant dense<0.000000e+00> : vector<16x128xf32>
    %11 = tpu.matmul %9, %10, %cst_8 {dimension_numbers = #tpu.dot_dimension_numbers<[1], [0], [0], [1], [0, 0, 1, 1], [], []>} : vector<16x128xbf16>, vector<128x128xbf16>, vector<16x128xf32> -> vector<16x128xf32>
    %c0_9 = arith.constant 0 : index
    %c0_10 = arith.constant 0 : index
    %12 = vector.load %arg5[%c0_9, %c0_10] : memref<1x128xf32, #tpu.memory_space<vmem>>, vector<1x128xf32>
    %13 = vector.broadcast %12 : vector<1x128xf32> to vector<16x128xf32>
    %14 = arith.addf %11, %13 : vector<16x128xf32>
    %15 = math.tanh %14 : vector<16x128xf32>
    %16 = arith.truncf %15 : vector<16x128xf32> to vector<16x128xbf16>
    %c0_11 = arith.constant 0 : index
    %c0_12 = arith.constant 0 : index
    %17 = vector.load %arg6[%c0_11, %c0_12] : memref<128x128xbf16, #tpu.memory_space<vmem>>, vector<128x128xbf16>
    %cst_13 = arith.constant dense<0.000000e+00> : vector<16x128xf32>
    %18 = tpu.matmul %16, %17, %cst_13 {dimension_numbers = #tpu.dot_dimension_numbers<[1], [0], [0], [1], [0, 0, 1, 1], [], []>} : vector<16x128xbf16>, vector<128x128xbf16>, vector<16x128xf32> -> vector<16x128xf32>
    %c0_14 = arith.constant 0 : index
    %c0_15 = arith.constant 0 : index
    %19 = vector.load %arg7[%c0_14, %c0_15] : memref<1x128xf32, #tpu.memory_space<vmem>>, vector<1x128xf32>
    %20 = vector.broadcast %19 : vector<1x128xf32> to vector<16x128xf32>
    %21 = arith.addf %18, %20 : vector<16x128xf32>
    %22 = arith.truncf %21 : vector<16x128xf32> to vector<16x128xbf16>
    %c0_16 = arith.constant 0 : index
    %c0_17 = arith.constant 0 : index
    %23 = vector.load %arg8[%c0_16, %c0_17] : memref<16x128xbf16, #tpu.memory_space<vmem>>, vector<16x128xbf16>
    tpu.vector_store %arg8[%c0_16, %c0_17], %22 {strides = array<i32>} : memref<16x128xbf16, #tpu.memory_space<vmem>>, vector<16x128xbf16>,
    return
  }
  func.func @transform_0(%arg0: i32) -> (i32, i32) {
    %c0_i32 = arith.constant 0 : i32
    %c0_i32_0 = arith.constant 0 : i32
    return %arg0, %c0_i32 : i32, i32
  }
  func.func @transform_1(%arg0: i32) -> (i32, i32) {
    %c0_i32 = arith.constant 0 : i32
    %c0_i32_0 = arith.constant 0 : i32
    %c0_i32_1 = arith.constant 0 : i32
    return %c0_i32, %c0_i32_0 : i32, i32
  }
  func.func @transform_2(%arg0: i32) -> (i32, i32) {
    %c0_i32 = arith.constant 0 : i32
    %c0_i32_0 = arith.constant 0 : i32
    %c0_i32_1 = arith.constant 0 : i32
    return %c0_i32, %c0_i32_0 : i32, i32
  }
  func.func @transform_3(%arg0: i32) -> (i32, i32) {
    %c0_i32 = arith.constant 0 : i32
    %c0_i32_0 = arith.constant 0 : i32
    %c0_i32_1 = arith.constant 0 : i32
    return %c0_i32, %c0_i32_0 : i32, i32
  }
  func.func @transform_4(%arg0: i32) -> (i32, i32) {
    %c0_i32 = arith.constant 0 : i32
    %c0_i32_0 = arith.constant 0 : i32
    %c0_i32_1 = arith.constant 0 : i32
    return %c0_i32, %c0_i32_0 : i32, i32
  }
  func.func @transform_5(%arg0: i32) -> (i32, i32) {
    %c0_i32 = arith.constant 0 : i32
    %c0_i32_0 = arith.constant 0 : i32
    %c0_i32_1 = arith.constant 0 : i32
    return %c0_i32, %c0_i32_0 : i32, i32
  }
  func.func @transform_6(%arg0: i32) -> (i32, i32) {
    %c0_i32 = arith.constant 0 : i32
    %c0_i32_0 = arith.constant 0 : i32
    %c0_i32_1 = arith.constant 0 : i32
    return %c0_i32, %c0_i32_0 : i32, i32
  }
  func.func @transform_7(%arg0: i32) -> (i32, i32) {
    %c0_i32 = arith.constant 0 : i32
    %c0_i32_0 = arith.constant 0 : i32
    return %arg0, %c0_i32 : i32, i32
  }
}

</mosaic_0001>

<llo_original>
// kernel: tpu_custom_call.1
$region0: #{tpu_custom_call.1}
  #allocation0 [shape = 'u32[]', space=smem, size = 0x4, offset = 0x4, fixed_abs, tag = 'smem constant byte address 0x4 - core index']
  #allocation1 [shape = 'u32[72,128]{1,0:T(1,128)}', space=vmem, size = 0x9000, scoped, tag = 'internal scratch']
  %s0 = inlined_call_operand.hbm [shape: f32[16,784], index: 0, kind: input, shape index: {}]
  %s1 = inlined_call_operand.hbm [shape: bf16[784,128], index: 1, kind: input, shape index: {}]
  %s2 = inlined_call_operand.vmem [shape: f32[1,128], index: 2, kind: input, shape index: {}]
  %s3 = inlined_call_operand.hbm [shape: bf16[128,128], index: 3, kind: input, shape index: {}]
  %s4 = inlined_call_operand.vmem [shape: f32[1,128], index: 4, kind: input, shape index: {}]
  %s5 = inlined_call_operand.hbm [shape: bf16[128,128], index: 5, kind: input, shape index: {}]
  %s6 = inlined_call_operand.vmem [shape: f32[1,128], index: 6, kind: input, shape index: {}]
  %s7 = inlined_call_operand.hbm [shape: bf16[16,128], index: 7, kind: output, shape index: {}]
  %s8 = sld [smem:[#allocation0]]
  $region54: #{tpu_custom_call.1} parent=0
    _
  %s10 = ssub.s32 1, %s8
  %s11 = scalar_select 0, %s10, %s8
  $region1: #{tpu_custom_call.1} parent=0
    #allocation2 [shape = 'u8[57344]{0}', space=vmem, size = 0xe000, scoped, tag = 'input window, operand 0, single buffered']
    #allocation3 [shape = 's32[1]{0}', space=sflag, size = 0x4, scoped, tag = 'scoped memory for tpu_custom_call.1']
    #allocation4 [shape = 's32[1]{0}', space=sflag, size = 0x4, scoped, tag = 'scoped memory for tpu_custom_call.1']
    #allocation5 [shape = 'u8[200704]{0}', space=vmem, size = 0x31000, scoped, tag = 'input window, operand 1, single buffered']
    #allocation6 [shape = 's32[1]{0}', space=sflag, size = 0x4, scoped, tag = 'scoped memory for tpu_custom_call.1']
    #allocation7 [shape = 'u8[32768]{0}', space=vmem, size = 0x8000, scoped, tag = 'input window, operand 3, single buffered']
    #allocation8 [shape = 'u8[32768]{0}', space=vmem, size = 0x8000, scoped, tag = 'input window, operand 5, single buffered']
    #allocation9 [shape = 's32[1]{0}', space=sflag, size = 0x4, scoped, tag = 'scoped memory for tpu_custom_call.1']
    #allocation10 [shape = 'u8[4096]{0}', space=vmem, size = 0x1000, scoped, tag = 'output window, operand 0, single buffered']
    %12 = vsyncpa [#allocation3], 0
    %13 = vsyncpa [#allocation6], 0
    %14 = vsyncpa [#allocation9], 0
    %15 = vsyncpa [#allocation4], 0
    // Predicated region
    $region2: #{tpu_custom_call.1} parent=1 // pred_check
      _
    $region3: #{tpu_custom_call.1} parent=1 // pred_check_branch
      %17 = sbr.rel (0) target = $region5
    $region4: #{tpu_custom_call.1} parent=1 // pred_region
      %19 = vsyncadd [#allocation3], 0
      %s20 = sshll.u32 %s0, 4
      %s21 = int_to_ptr.hbm [resolvable:$true] %s20
      %s22 = sshll.u32 [#allocation2], 4
      %s23 = int_to_ptr.vmem [resolvable:$true] %s22
      %28 = dma.hbm_to_vmem [thread:$0]  %s21, 1792, %s23, [#allocation3], 896, 896, 56
    $region5: #{tpu_custom_call.1} parent=1 // pred_fallthru
      _
    // Predicated region
    $region6: #{tpu_custom_call.1} parent=1 // pred_check
      _
    $region7: #{tpu_custom_call.1} parent=1 // pred_check_branch
      %30 = sbr.rel (0) target = $region9
    $region8: #{tpu_custom_call.1} parent=1 // pred_region
      %32 = vsyncadd [#allocation6], 0
      %s33 = sshll.u32 %s1, 4
      %s34 = int_to_ptr.hbm [resolvable:$true] %s33
      %s35 = sshll.u32 [#allocation5], 4
      %s36 = int_to_ptr.vmem [resolvable:$true] %s35
      %41 = dma.hbm_to_vmem [thread:$0]  %s34, 6272, %s36, [#allocation6], 64, 64, 4
    $region9: #{tpu_custom_call.1} parent=1 // pred_fallthru
      _
    // Predicated region
    $region10: #{tpu_custom_call.1} parent=1 // pred_check
      _
    $region11: #{tpu_custom_call.1} parent=1 // pred_check_branch
      %43 = sbr.rel (0) target = $region13
    $region12: #{tpu_custom_call.1} parent=1 // pred_region
      _
    $region13: #{tpu_custom_call.1} parent=1 // pred_fallthru
      _
    // Predicated region
    $region14: #{tpu_custom_call.1} parent=1 // pred_check
      _
    $region15: #{tpu_custom_call.1} parent=1 // pred_check_branch
      %45 = sbr.rel (0) target = $region17
    $region16: #{tpu_custom_call.1} parent=1 // pred_region
      %47 = vsyncadd [#allocation6], 0
      %s48 = sshll.u32 %s3, 4
      %s49 = int_to_ptr.hbm [resolvable:$true] %s48
      %s50 = sshll.u32 [#allocation7], 4
      %s51 = int_to_ptr.vmem [resolvable:$true] %s50
      %56 = dma.hbm_to_vmem [thread:$0]  %s49, 1024, %s51, [#allocation6], 64, 64, 4
    $region17: #{tpu_custom_call.1} parent=1 // pred_fallthru
      _
    // Predicated region
    $region18: #{tpu_custom_call.1} parent=1 // pred_check
      _
    $region19: #{tpu_custom_call.1} parent=1 // pred_check_branch
      %58 = sbr.rel (0) target = $region21
    $region20: #{tpu_custom_call.1} parent=1 // pred_region
      _
    $region21: #{tpu_custom_call.1} parent=1 // pred_fallthru
      _
    // Predicated region
    $region22: #{tpu_custom_call.1} parent=1 // pred_check
      _
    $region23: #{tpu_custom_call.1} parent=1 // pred_check_branch
      %60 = sbr.rel (0) target = $region25
    $region24: #{tpu_custom_call.1} parent=1 // pred_region
      %62 = vsyncadd [#allocation9], 0
      %s63 = sshll.u32 %s5, 4
      %s64 = int_to_ptr.hbm [resolvable:$true] %s63
      %s65 = sshll.u32 [#allocation8], 4
      %s66 = int_to_ptr.vmem [resolvable:$true] %s65
      %71 = dma.hbm_to_vmem [thread:$0]  %s64, 1024, %s66, [#allocation9], 64, 64, 4
    $region25: #{tpu_custom_call.1} parent=1 // pred_fallthru
      _
    // Predicated region
    $region26: #{tpu_custom_call.1} parent=1 // pred_check
      _
    $region27: #{tpu_custom_call.1} parent=1 // pred_check_branch
      %73 = sbr.rel (0) target = $region29
    $region28: #{tpu_custom_call.1} parent=1 // pred_region
      _
    $region29: #{tpu_custom_call.1} parent=1 // pred_fallthru
      _
    // Predicated region
    $region30: #{tpu_custom_call.1} parent=1 // pred_check
      _
    $region31: #{tpu_custom_call.1} parent=1 // pred_check_branch
      %75 = sbr.rel (0) target = $region33
    $region32: #{tpu_custom_call.1} parent=1 // pred_region
      %77 = dma.done [#allocation3], 1792
    $region33: #{tpu_custom_call.1} parent=1 // pred_fallthru
      _
    // Predicated region
    $region34: #{tpu_custom_call.1} parent=1 // pred_check
      _
    $region35: #{tpu_custom_call.1} parent=1 // pred_check_branch
      %79 = sbr.rel (0) target = $region37
    $region36: #{tpu_custom_call.1} parent=1 // pred_region
      %81 = dma.done [#allocation6], 6272
    $region37: #{tpu_custom_call.1} parent=1 // pred_fallthru
      _
    // Predicated region
    $region38: #{tpu_custom_call.1} parent=1 // pred_check
      _
    $region39: #{tpu_custom_call.1} parent=1 // pred_check_branch
      %83 = sbr.rel (0) target = $region41
    $region40: #{tpu_custom_call.1} parent=1 // pred_region
      %85 = dma.done [#allocation6], 1024
    $region41: #{tpu_custom_call.1} parent=1 // pred_fallthru
      _
    // Predicated region
    $region42: #{tpu_custom_call.1} parent=1 // pred_check
      _
    $region43: #{tpu_custom_call.1} parent=1 // pred_check_branch
      %87 = sbr.rel (0) target = $region45
    $region44: #{tpu_custom_call.1} parent=1 // pred_region
      %89 = dma.done [#allocation9], 1024
    $region45: #{tpu_custom_call.1} parent=1 // pred_fallthru
      _
    %v91 = vld [vmem:[#allocation2] sm:$0xff]
    %v92 = vld [vmem:[#allocation2 + $0x8] sm:$0xff]
    %v93 = vld [vmem:[#allocation2 + $0x10] sm:$0xff]
    %v94 = vld [vmem:[#allocation2 + $0x18] sm:$0xff]
    %v95 = vld [vmem:[#allocation2 + $0x20] sm:$0xff]
    %v96 = vld [vmem:[#allocation2 + $0x28] sm:$0xff]
    %v97 = vld [vmem:[#allocation2 + $0x30] sm:$0xff]
    %v98 = vld [vmem:[#allocation2 + $0x38] sm:$0xff]
    %v99 = vld [vmem:[#allocation2 + $0x40] sm:$0xff]
    %v100 = vld [vmem:[#allocation2 + $0x48] sm:$0xff]
    %v101 = vld [vmem:[#allocation2 + $0x50] sm:$0xff]
    %v102 = vld [vmem:[#allocation2 + $0x58] sm:$0xff]
    %v103 = vld [vmem:[#allocation2 + $0x60] sm:$0xff]
    %v104 = vld [vmem:[#allocation2 + $0x68] sm:$0xff]
    %v105 = vpack.c.bf16 %v98, %v91
    %v106 = vpack.c.bf16 %v99, %v92
    %v107 = vpack.c.bf16 %v100, %v93
    %v108 = vpack.c.bf16 %v101, %v94
    %v109 = vpack.c.bf16 %v102, %v95
    %v110 = vpack.c.bf16 %v103, %v96
    %v111 = vpack.c.bf16 %v104, %v97
    %v112 = vld [vmem:[#allocation5] sm:$0xf]
    %v113 = vld [vmem:[#allocation5 + $0x4] sm:$0xf]
    %v114 = vld [vmem:[#allocation5 + $0x8] sm:$0xf]
    %v115 = vld [vmem:[#allocation5 + $0xc] sm:$0xf]
    %v116 = vld [vmem:[#allocation5 + $0x10] sm:$0xf]
    %v117 = vld [vmem:[#allocation5 + $0x14] sm:$0xf]
    %v118 = vld [vmem:[#allocation5 + $0x18] sm:$0xf]
    %v119 = vld [vmem:[#allocation5 + $0x1c] sm:$0xf]
    %v120 = vld [vmem:[#allocation5 + $0x20] sm:$0xf]
    %v121 = vld [vmem:[#allocation5 + $0x24] sm:$0xf]
    %v122 = vld [vmem:[#allocation5 + $0x28] sm:$0xf]
    %v123 = vld [vmem:[#allocation5 + $0x2c] sm:$0xf]
    %v124 = vld [vmem:[#allocation5 + $0x30] sm:$0xf]
    %v125 = vld [vmem:[#allocation5 + $0x34] sm:$0xf]
    %v126 = vld [vmem:[#allocation5 + $0x38] sm:$0xf]
    %v127 = vld [vmem:[#allocation5 + $0x3c] sm:$0xf]
    %v128 = vld [vmem:[#allocation5 + $0x40] sm:$0xf]
    %v129 = vld [vmem:[#allocation5 + $0x44] sm:$0xf]
    %v130 = vld [vmem:[#allocation5 + $0x48] sm:$0xf]
    %v131 = vld [vmem:[#allocation5 + $0x4c] sm:$0xf]
    %v132 = vld [vmem:[#allocation5 + $0x50] sm:$0xf]
    %v133 = vld [vmem:[#allocation5 + $0x54] sm:$0xf]
    %v134 = vld [vmem:[#allocation5 + $0x58] sm:$0xf]
    %v135 = vld [vmem:[#allocation5 + $0x5c] sm:$0xf]
    %v136 = vld [vmem:[#allocation5 + $0x60] sm:$0xf]
    %v137 = vld [vmem:[#allocation5 + $0x64] sm:$0xf]
    %v138 = vld [vmem:[#allocation5 + $0x68] sm:$0xf]
    %v139 = vld [vmem:[#allocation5 + $0x6c] sm:$0xf]
    %v140 = vld [vmem:[#allocation5 + $0x70] sm:$0xf]
    %v141 = vld [vmem:[#allocation5 + $0x74] sm:$0xf]
    %v142 = vld [vmem:[#allocation5 + $0x78] sm:$0xf]
    %v143 = vld [vmem:[#allocation5 + $0x7c] sm:$0xf]
    %v144 = vld [vmem:[#allocation5 + $0x80] sm:$0xf]
    %v145 = vld [vmem:[#allocation5 + $0x84] sm:$0xf]
    %v146 = vld [vmem:[#allocation5 + $0x88] sm:$0xf]
    %v147 = vld [vmem:[#allocation5 + $0x8c] sm:$0xf]
    %v148 = vld [vmem:[#allocation5 + $0x90] sm:$0xf]
    %v149 = vld [vmem:[#allocation5 + $0x94] sm:$0xf]
    %v150 = vld [vmem:[#allocation5 + $0x98] sm:$0xf]
    %v151 = vld [vmem:[#allocation5 + $0x9c] sm:$0xf]
    %v152 = vld [vmem:[#allocation5 + $0xa0] sm:$0xf]
    %v153 = vld [vmem:[#allocation5 + $0xa4] sm:$0xf]
    %v154 = vld [vmem:[#allocation5 + $0xa8] sm:$0xf]
    %v155 = vld [vmem:[#allocation5 + $0xac] sm:$0xf]
    %v156 = vld [vmem:[#allocation5 + $0xb0] sm:$0xf]
    %v157 = vld [vmem:[#allocation5 + $0xb4] sm:$0xf]
    %v158 = vld [vmem:[#allocation5 + $0xb8] sm:$0xf]
    %v159 = vld [vmem:[#allocation5 + $0xbc] sm:$0xf]
    %v160 = vld [vmem:[#allocation5 + $0xc0] sm:$0xf]
    %v161 = vld [vmem:[#allocation5 + $0xc4] sm:$0xf]
    %v162 = vld [vmem:[#allocation5 + $0xc8] sm:$0xf]
    %v163 = vld [vmem:[#allocation5 + $0xcc] sm:$0xf]
    %v164 = vld [vmem:[#allocation5 + $0xd0] sm:$0xf]
    %v165 = vld [vmem:[#allocation5 + $0xd4] sm:$0xf]
    %v166 = vld [vmem:[#allocation5 + $0xd8] sm:$0xf]
    %v167 = vld [vmem:[#allocation5 + $0xdc] sm:$0xf]
    %v168 = vld [vmem:[#allocation5 + $0xe0] sm:$0xf]
    %v169 = vld [vmem:[#allocation5 + $0xe4] sm:$0xf]
    %v170 = vld [vmem:[#allocation5 + $0xe8] sm:$0xf]
    %v171 = vld [vmem:[#allocation5 + $0xec] sm:$0xf]
    %v172 = vld [vmem:[#allocation5 + $0xf0] sm:$0xf]
    %v173 = vld [vmem:[#allocation5 + $0xf4] sm:$0xf]
    %v174 = vld [vmem:[#allocation5 + $0xf8] sm:$0xf]
    %v175 = vld [vmem:[#allocation5 + $0xfc] sm:$0xf]
    %v176 = vld [vmem:[#allocation5 + $0x100] sm:$0xf]
    %v177 = vld [vmem:[#allocation5 + $0x104] sm:$0xf]
    %v178 = vld [vmem:[#allocation5 + $0x108] sm:$0xf]
    %v179 = vld [vmem:[#allocation5 + $0x10c] sm:$0xf]
    %v180 = vld [vmem:[#allocation5 + $0x110] sm:$0xf]
    %v181 = vld [vmem:[#allocation5 + $0x114] sm:$0xf]
    %v182 = vld [vmem:[#allocation5 + $0x118] sm:$0xf]
    %v183 = vld [vmem:[#allocation5 + $0x11c] sm:$0xf]
    %v184 = vld [vmem:[#allocation5 + $0x120] sm:$0xf]
    %v185 = vld [vmem:[#allocation5 + $0x124] sm:$0xf]
    %v186 = vld [vmem:[#allocation5 + $0x128] sm:$0xf]
    %v187 = vld [vmem:[#allocation5 + $0x12c] sm:$0xf]
    %v188 = vld [vmem:[#allocation5 + $0x130] sm:$0xf]
    %v189 = vld [vmem:[#allocation5 + $0x134] sm:$0xf]
    %v190 = vld [vmem:[#allocation5 + $0x138] sm:$0xf]
    %v191 = vld [vmem:[#allocation5 + $0x13c] sm:$0xf]
    %v192 = vld [vmem:[#allocation5 + $0x140] sm:$0xf]
    %v193 = vld [vmem:[#allocation5 + $0x144] sm:$0xf]
    %v194 = vld [vmem:[#allocation5 + $0x148] sm:$0xf]
    %v195 = vld [vmem:[#allocation5 + $0x14c] sm:$0xf]
    %v196 = vld [vmem:[#allocation5 + $0x150] sm:$0xf]
    %v197 = vld [vmem:[#allocation5 + $0x154] sm:$0xf]
    %v198 = vld [vmem:[#allocation5 + $0x158] sm:$0xf]
    %v199 = vld [vmem:[#allocation5 + $0x15c] sm:$0xf]
    %v200 = vld [vmem:[#allocation5 + $0x160] sm:$0xf]
    %v201 = vld [vmem:[#allocation5 + $0x164] sm:$0xf]
    %v202 = vld [vmem:[#allocation5 + $0x168] sm:$0xf]
    %v203 = vld [vmem:[#allocation5 + $0x16c] sm:$0xf]
    %v204 = vld [vmem:[#allocation5 + $0x170] sm:$0xf]
    %v205 = vld [vmem:[#allocation5 + $0x174] sm:$0xf]
    %v206 = vld [vmem:[#allocation5 + $0x178] sm:$0xf]
    %v207 = vld [vmem:[#allocation5 + $0x17c] sm:$0xf]
    %v208 = vld [vmem:[#allocation5 + $0x180] sm:$0xf]
    %v209 = vld [vmem:[#allocation5 + $0x184] sm:$0xf]
    %v210 = vld [vmem:[%s2] sm:$0x1]
    %v212 = vperm.slane %v210, 0
    %v312 = vunpack.c.l.b16 %v112
    %v313 = vunpack.c.l.b16 %v113
    %v314 = vunpack.c.l.b16 %v114
    %v315 = vunpack.c.l.b16 %v115
    %v316 = vunpack.c.l.b16 %v116
    %v317 = vunpack.c.l.b16 %v117
    %v318 = vunpack.c.l.b16 %v118
    %v319 = vunpack.c.l.b16 %v119
    %v320 = vunpack.c.l.b16 %v120
    %v321 = vunpack.c.l.b16 %v121
    %v322 = vunpack.c.l.b16 %v122
    %v323 = vunpack.c.l.b16 %v123
    %v324 = vunpack.c.l.b16 %v124
    %v325 = vunpack.c.l.b16 %v125
    %v326 = vunpack.c.l.b16 %v126
    %v327 = vunpack.c.l.b16 %v127
    %v328 = vunpack.c.l.b16 %v128
    %v329 = vunpack.c.l.b16 %v129
    %v330 = vunpack.c.l.b16 %v130
    %v331 = vunpack.c.l.b16 %v131
    %v332 = vunpack.c.l.b16 %v132
    %v333 = vunpack.c.l.b16 %v133
    %v334 = vunpack.c.l.b16 %v134
    %v335 = vunpack.c.l.b16 %v135
    %v336 = vunpack.c.l.b16 %v136
    %v337 = vunpack.c.l.b16 %v137
    %v338 = vunpack.c.l.b16 %v138
    %v339 = vunpack.c.l.b16 %v139
    %v340 = vunpack.c.l.b16 %v140
    %v341 = vunpack.c.l.b16 %v141
    %v342 = vunpack.c.l.b16 %v142
    %v343 = vunpack.c.l.b16 %v143
    %v344 = vunpack.c.l.b16 %v144
    %v345 = vunpack.c.l.b16 %v145
    %v346 = vunpack.c.l.b16 %v146
    %v347 = vunpack.c.l.b16 %v147
    %v348 = vunpack.c.l.b16 %v148
    %v349 = vunpack.c.l.b16 %v149
    %v350 = vunpack.c.l.b16 %v150
    %v351 = vunpack.c.l.b16 %v151
    %v352 = vunpack.c.l.b16 %v152
    %v353 = vunpack.c.l.b16 %v153
    %v354 = vunpack.c.l.b16 %v154
    %v355 = vunpack.c.l.b16 %v155
    %v356 = vunpack.c.l.b16 %v156
    %v357 = vunpack.c.l.b16 %v157
    %v358 = vunpack.c.l.b16 %v158
    %v359 = vunpack.c.l.b16 %v159
    %v360 = vunpack.c.l.b16 %v160
    %v361 = vunpack.c.l.b16 %v161
    %v362 = vunpack.c.l.b16 %v162
    %v363 = vunpack.c.l.b16 %v163
    %v364 = vunpack.c.l.b16 %v164
    %v365 = vunpack.c.l.b16 %v165
    %v366 = vunpack.c.l.b16 %v166
    %v367 = vunpack.c.l.b16 %v167
    %v368 = vunpack.c.l.b16 %v168
    %v369 = vunpack.c.l.b16 %v169
    %v370 = vunpack.c.l.b16 %v170
    %v371 = vunpack.c.l.b16 %v171
    %v372 = vunpack.c.l.b16 %v172
    %v373 = vunpack.c.l.b16 %v173
    %v374 = vunpack.c.l.b16 %v174
    %v375 = vunpack.c.l.b16 %v175
    %v376 = vunpack.c.l.b16 %v176
    %v377 = vunpack.c.l.b16 %v177
    %v378 = vunpack.c.l.b16 %v178
    %v379 = vunpack.c.l.b16 %v179
    %v380 = vunpack.c.l.b16 %v180
    %v381 = vunpack.c.l.b16 %v181
    %v382 = vunpack.c.l.b16 %v182
    %v383 = vunpack.c.l.b16 %v183
    %v384 = vunpack.c.l.b16 %v184
    %v385 = vunpack.c.l.b16 %v185
    %v386 = vunpack.c.l.b16 %v186
    %v387 = vunpack.c.l.b16 %v187
    %v388 = vunpack.c.l.b16 %v188
    %v389 = vunpack.c.l.b16 %v189
    %v390 = vunpack.c.l.b16 %v190
    %v391 = vunpack.c.l.b16 %v191
    %v392 = vunpack.c.l.b16 %v192
    %v393 = vunpack.c.l.b16 %v193
    %v394 = vunpack.c.l.b16 %v194
    %v395 = vunpack.c.l.b16 %v195
    %v396 = vunpack.c.l.b16 %v196
    %v397 = vunpack.c.l.b16 %v197
    %v398 = vunpack.c.l.b16 %v198
    %v399 = vunpack.c.l.b16 %v199
    %v400 = vunpack.c.l.b16 %v200
    %v401 = vunpack.c.l.b16 %v201
    %v402 = vunpack.c.l.b16 %v202
    %v403 = vunpack.c.l.b16 %v203
    %v404 = vunpack.c.l.b16 %v204
    %v405 = vunpack.c.l.b16 %v205
    %v406 = vunpack.c.l.b16 %v206
    %v407 = vunpack.c.l.b16 %v207
    %v408 = vunpack.c.l.b16 %v208
    %v409 = vunpack.c.l.b16 %v209
    %v410 = vpack.c.b16 %v313, %v312
    %v411 = vpack.c.b16 %v315, %v314
    %v412 = vpack.c.b16 %v317, %v316
    %v413 = vpack.c.b16 %v319, %v318
    %v414 = vpack.c.b16 %v321, %v320
    %v415 = vpack.c.b16 %v323, %v322
    %v416 = vpack.c.b16 %v325, %v324
    %v417 = vpack.c.b16 %v327, %v326
    %v418 = vpack.c.b16 %v329, %v328
    %v419 = vpack.c.b16 %v331, %v330
    %v420 = vpack.c.b16 %v333, %v332
    %v421 = vpack.c.b16 %v335, %v334
    %v422 = vpack.c.b16 %v337, %v336
    %v423 = vpack.c.b16 %v339, %v338
    %v424 = vpack.c.b16 %v341, %v340
    %v425 = vpack.c.b16 %v343, %v342
    %v426 = vpack.c.b16 %v345, %v344
    %v427 = vpack.c.b16 %v347, %v346
    %v428 = vpack.c.b16 %v349, %v348
    %v429 = vpack.c.b16 %v351, %v350
    %v430 = vpack.c.b16 %v353, %v352
    %v431 = vpack.c.b16 %v355, %v354
    %v432 = vpack.c.b16 %v357, %v356
    %v433 = vpack.c.b16 %v359, %v358
    %v434 = vpack.c.b16 %v361, %v360
    %v435 = vpack.c.b16 %v363, %v362
    %v436 = vpack.c.b16 %v365, %v364
    %v437 = vpack.c.b16 %v367, %v366
    %v438 = vpack.c.b16 %v369, %v368
    %v439 = vpack.c.b16 %v371, %v370
    %v440 = vpack.c.b16 %v373, %v372
    %v441 = vpack.c.b16 %v375, %v374
    %v442 = vpack.c.b16 %v377, %v376
    %v443 = vpack.c.b16 %v379, %v378
    %v444 = vpack.c.b16 %v381, %v380
    %v445 = vpack.c.b16 %v383, %v382
    %v446 = vpack.c.b16 %v385, %v384
    %v447 = vpack.c.b16 %v387, %v386
    %v448 = vpack.c.b16 %v389, %v388
    %v449 = vpack.c.b16 %v391, %v390
    %v450 = vpack.c.b16 %v393, %v392
    %v451 = vpack.c.b16 %v395, %v394
    %v452 = vpack.c.b16 %v397, %v396
    %v453 = vpack.c.b16 %v399, %v398
    %v454 = vpack.c.b16 %v401, %v400
    %v455 = vpack.c.b16 %v403, %v402
    %v456 = vpack.c.b16 %v405, %v404
    %v457 = vpack.c.b16 %v407, %v406
    %v458 = vpack.c.b16 %v409, %v408
    %vm508 = vcmask 130048
    %v510 = vsel %vm508, %v111, 0
    %512 = vmatpush.bf16.msra.mxu0 %v417
    %513 = vmatpush.bf16.msra.mxu0 %v416
    %514 = vmatpush.bf16.msra.mxu0 %v415
    %515 = vmatpush.bf16.msra.mxu0 %v414
    %516 = vmatpush.bf16.msra.mxu0 %v413
    %517 = vmatpush.bf16.msra.mxu0 %v412
    %518 = vmatpush.bf16.msra.mxu0 %v411
    %519 = vmatpush.bf16.msra.mxu0 %v410
    %520 = vmatmul.bf16.gmra.mxu0 %v105
    %v521 = vpop.f32.mrf.mxu0
    %v522 = vadd.f32 %v212, %v521
    %v523 = vpop.f32.mrf.mxu0
    %v524 = vadd.f32 %v212, %v523
    %525 = vdwg.mxu0
    %526 = vmatpush.bf16.msra.mxu0 %v425
    %527 = vmatpush.bf16.msra.mxu0 %v424
    %528 = vmatpush.bf16.msra.mxu0 %v423
    %529 = vmatpush.bf16.msra.mxu0 %v422
    %530 = vmatpush.bf16.msra.mxu0 %v421
    %531 = vmatpush.bf16.msra.mxu0 %v420
    %532 = vmatpush.bf16.msra.mxu0 %v419
    %533 = vmatpush.bf16.msra.mxu0 %v418
    %534 = vmatmul.bf16.gmra.mxu0 %v106
    %v535 = vpop.f32.mrf.mxu0
    %v536 = vadd.f32 %v522, %v535
    %v537 = vpop.f32.mrf.mxu0
    %v538 = vadd.f32 %v524, %v537
    %539 = vdwg.mxu0
    %540 = vmatpush.bf16.msra.mxu0 %v433
    %541 = vmatpush.bf16.msra.mxu0 %v432
    %542 = vmatpush.bf16.msra.mxu0 %v431
    %543 = vmatpush.bf16.msra.mxu0 %v430
    %544 = vmatpush.bf16.msra.mxu0 %v429
    %545 = vmatpush.bf16.msra.mxu0 %v428
    %546 = vmatpush.bf16.msra.mxu0 %v427
    %547 = vmatpush.bf16.msra.mxu0 %v426
    %548 = vmatmul.bf16.gmra.mxu0 %v107
    %v549 = vpop.f32.mrf.mxu0
    %v550 = vadd.f32 %v536, %v549
    %v551 = vpop.f32.mrf.mxu0
    %v552 = vadd.f32 %v538, %v551
    %553 = vdwg.mxu0
    %554 = vmatpush.bf16.msra.mxu0 %v441
    %555 = vmatpush.bf16.msra.mxu0 %v440
    %556 = vmatpush.bf16.msra.mxu0 %v439
    %557 = vmatpush.bf16.msra.mxu0 %v438
    %558 = vmatpush.bf16.msra.mxu0 %v437
    %559 = vmatpush.bf16.msra.mxu0 %v436
    %560 = vmatpush.bf16.msra.mxu0 %v435
    %561 = vmatpush.bf16.msra.mxu0 %v434
    %562 = vmatmul.bf16.gmra.mxu0 %v108
    %v563 = vpop.f32.mrf.mxu0
    %v564 = vadd.f32 %v550, %v563
    %v565 = vpop.f32.mrf.mxu0
    %v566 = vadd.f32 %v552, %v565
    %567 = vdwg.mxu0
    %568 = vmatpush.bf16.msra.mxu0 %v449
    %569 = vmatpush.bf16.msra.mxu0 %v448
    %570 = vmatpush.bf16.msra.mxu0 %v447
    %571 = vmatpush.bf16.msra.mxu0 %v446
    %572 = vmatpush.bf16.msra.mxu0 %v445
    %573 = vmatpush.bf16.msra.mxu0 %v444
    %574 = vmatpush.bf16.msra.mxu0 %v443
    %575 = vmatpush.bf16.msra.mxu0 %v442
    %576 = vmatmul.bf16.gmra.mxu0 %v109
    %v577 = vpop.f32.mrf.mxu0
    %v578 = vadd.f32 %v564, %v577
    %v579 = vpop.f32.mrf.mxu0
    %v580 = vadd.f32 %v566, %v579
    %581 = vdwg.mxu0
    %582 = vmatpush.bf16.msra.mxu0 %v457
    %583 = vmatpush.bf16.msra.mxu0 %v456
    %584 = vmatpush.bf16.msra.mxu0 %v455
    %585 = vmatpush.bf16.msra.mxu0 %v454
    %586 = vmatpush.bf16.msra.mxu0 %v453
    %587 = vmatpush.bf16.msra.mxu0 %v452
    %588 = vmatpush.bf16.msra.mxu0 %v451
    %589 = vmatpush.bf16.msra.mxu0 %v450
    %590 = vmatmul.bf16.gmra.mxu0 %v110
    %v591 = vpop.f32.mrf.mxu0
    %v592 = vadd.f32 %v578, %v591
    %v593 = vpop.f32.mrf.mxu0
    %v594 = vadd.f32 %v580, %v593
    %595 = vdwg.mxu0
    %596 = vmatpush.bf16.msra.mxu0 0
    %597 = vmatpush.bf16.msra.mxu0 0
    %598 = vmatpush.bf16.msra.mxu0 0
    %599 = vmatpush.bf16.msra.mxu0 0
    %600 = vmatpush.bf16.msra.mxu0 0
    %601 = vmatpush.bf16.msra.mxu0 0
    %602 = vmatpush.bf16.msra.mxu0 0
    %603 = vmatpush.bf16.msra.mxu0 %v458
    %604 = vmatmul.bf16.gmra.mxu0 %v510
    %v605 = vpop.f32.mrf.mxu0
    %v606 = vadd.f32 %v592, %v605
    %v607 = vpop.f32.mrf.mxu0
    %v608 = vadd.f32 %v594, %v607
    %609 = vdwg.mxu0
    %v610 = vmax.f32 %v606, 0.0
    %v611 = vmax.f32 %v608, 0.0
    %v612 = vpack.c.bf16 %v611, %v610
    %v613 = vld [vmem:[#allocation7] sm:$0xf]
    %v614 = vld [vmem:[#allocation7 + $0x4] sm:$0xf]
    %v615 = vld [vmem:[#allocation7 + $0x8] sm:$0xf]
    %v616 = vld [vmem:[#allocation7 + $0xc] sm:$0xf]
    %v617 = vld [vmem:[#allocation7 + $0x10] sm:$0xf]
    %v618 = vld [vmem:[#allocation7 + $0x14] sm:$0xf]
    %v619 = vld [vmem:[#allocation7 + $0x18] sm:$0xf]
    %v620 = vld [vmem:[#allocation7 + $0x1c] sm:$0xf]
    %v621 = vld [vmem:[#allocation7 + $0x20] sm:$0xf]
    %v622 = vld [vmem:[#allocation7 + $0x24] sm:$0xf]
    %v623 = vld [vmem:[#allocation7 + $0x28] sm:$0xf]
    %v624 = vld [vmem:[#allocation7 + $0x2c] sm:$0xf]
    %v625 = vld [vmem:[#allocation7 + $0x30] sm:$0xf]
    %v626 = vld [vmem:[#allocation7 + $0x34] sm:$0xf]
    %v627 = vld [vmem:[#allocation7 + $0x38] sm:$0xf]
    %v628 = vld [vmem:[#allocation7 + $0x3c] sm:$0xf]
    %v629 = vld [vmem:[%s4] sm:$0x1]
    %v631 = vperm.slane %v629, 0
    %v649 = vunpack.c.l.b16 %v613
    %v650 = vunpack.c.l.b16 %v614
    %v651 = vunpack.c.l.b16 %v615
    %v652 = vunpack.c.l.b16 %v616
    %v653 = vunpack.c.l.b16 %v617
    %v654 = vunpack.c.l.b16 %v618
    %v655 = vunpack.c.l.b16 %v619
    %v656 = vunpack.c.l.b16 %v620
    %v657 = vunpack.c.l.b16 %v621
    %v658 = vunpack.c.l.b16 %v622
    %v659 = vunpack.c.l.b16 %v623
    %v660 = vunpack.c.l.b16 %v624
    %v661 = vunpack.c.l.b16 %v625
    %v662 = vunpack.c.l.b16 %v626
    %v663 = vunpack.c.l.b16 %v627
    %v664 = vunpack.c.l.b16 %v628
    %v665 = vpack.c.b16 %v650, %v649
    %v666 = vpack.c.b16 %v652, %v651
    %v667 = vpack.c.b16 %v654, %v653
    %v668 = vpack.c.b16 %v656, %v655
    %v669 = vpack.c.b16 %v658, %v657
    %v670 = vpack.c.b16 %v660, %v659
    %v671 = vpack.c.b16 %v662, %v661
    %v672 = vpack.c.b16 %v664, %v663
    %681 = vmatpush.bf16.msra.mxu0 %v672
    %682 = vmatpush.bf16.msra.mxu0 %v671
    %683 = vmatpush.bf16.msra.mxu0 %v670
    %684 = vmatpush.bf16.msra.mxu0 %v669
    %685 = vmatpush.bf16.msra.mxu0 %v668
    %686 = vmatpush.bf16.msra.mxu0 %v667
    %687 = vmatpush.bf16.msra.mxu0 %v666
    %688 = vmatpush.bf16.msra.mxu0 %v665
    %689 = vmatmul.bf16.gmra.mxu0 %v612
    %v690 = vpop.f32.mrf.mxu0
    %v691 = vadd.f32 %v631, %v690
    %v692 = vpop.f32.mrf.mxu0
    %v693 = vadd.f32 %v631, %v692
    %694 = vdwg.mxu0
    %v695 = vtanh.pop %v691
    %v696 = vtanh.pop %v693
    %v697 = vpack.c.bf16 %v696, %v695
    %v698 = vld [vmem:[#allocation8] sm:$0xf]
    %v699 = vld [vmem:[#allocation8 + $0x4] sm:$0xf]
    %v700 = vld [vmem:[#allocation8 + $0x8] sm:$0xf]
    %v701 = vld [vmem:[#allocation8 + $0xc] sm:$0xf]
    %v702 = vld [vmem:[#allocation8 + $0x10] sm:$0xf]
    %v703 = vld [vmem:[#allocation8 + $0x14] sm:$0xf]
    %v704 = vld [vmem:[#allocation8 + $0x18] sm:$0xf]
    %v705 = vld [vmem:[#allocation8 + $0x1c] sm:$0xf]
    %v706 = vld [vmem:[#allocation8 + $0x20] sm:$0xf]
    %v707 = vld [vmem:[#allocation8 + $0x24] sm:$0xf]
    %v708 = vld [vmem:[#allocation8 + $0x28] sm:$0xf]
    %v709 = vld [vmem:[#allocation8 + $0x2c] sm:$0xf]
    %v710 = vld [vmem:[#allocation8 + $0x30] sm:$0xf]
    %v711 = vld [vmem:[#allocation8 + $0x34] sm:$0xf]
    %v712 = vld [vmem:[#allocation8 + $0x38] sm:$0xf]
    %v713 = vld [vmem:[#allocation8 + $0x3c] sm:$0xf]
    %v714 = vld [vmem:[%s6] sm:$0x1]
    %v716 = vperm.slane %v714, 0
    %v734 = vunpack.c.l.b16 %v698
    %v735 = vunpack.c.l.b16 %v699
    %v736 = vunpack.c.l.b16 %v700
    %v737 = vunpack.c.l.b16 %v701
    %v738 = vunpack.c.l.b16 %v702
    %v739 = vunpack.c.l.b16 %v703
    %v740 = vunpack.c.l.b16 %v704
    %v741 = vunpack.c.l.b16 %v705
    %v742 = vunpack.c.l.b16 %v706
    %v743 = vunpack.c.l.b16 %v707
    %v744 = vunpack.c.l.b16 %v708
    %v745 = vunpack.c.l.b16 %v709
    %v746 = vunpack.c.l.b16 %v710
    %v747 = vunpack.c.l.b16 %v711
    %v748 = vunpack.c.l.b16 %v712
    %v749 = vunpack.c.l.b16 %v713
    %v750 = vpack.c.b16 %v735, %v734
    %v751 = vpack.c.b16 %v737, %v736
    %v752 = vpack.c.b16 %v739, %v738
    %v753 = vpack.c.b16 %v741, %v740
    %v754 = vpack.c.b16 %v743, %v742
    %v755 = vpack.c.b16 %v745, %v744
    %v756 = vpack.c.b16 %v747, %v746
    %v757 = vpack.c.b16 %v749, %v748
    %766 = vmatpush.bf16.msra.mxu0 %v757
    %767 = vmatpush.bf16.msra.mxu0 %v756
    %768 = vmatpush.bf16.msra.mxu0 %v755
    %769 = vmatpush.bf16.msra.mxu0 %v754
    %770 = vmatpush.bf16.msra.mxu0 %v753
    %771 = vmatpush.bf16.msra.mxu0 %v752
    %772 = vmatpush.bf16.msra.mxu0 %v751
    %773 = vmatpush.bf16.msra.mxu0 %v750
    %774 = vmatmul.bf16.gmra.mxu0 %v697
    %v775 = vpop.f32.mrf.mxu0
    %v776 = vadd.f32 %v716, %v775
    %v777 = vpop.f32.mrf.mxu0
    %v778 = vadd.f32 %v716, %v777
    %779 = vdwg.mxu0
    %v780 = vpack.c.bf16 %v776, %v776
    %v781 = vpack.c.bf16 %v778, %v778
    %782 = vst [vmem:[#allocation10] sm:$0xf] %v780
    %783 = vst [vmem:[#allocation10 + $0x4] sm:$0xf] %v781
    // Predicated region
    $region46: #{tpu_custom_call.1} parent=1 // pred_check
      _
    $region47: #{tpu_custom_call.1} parent=1 // pred_check_branch
      %785 = sbr.rel (0) target = $region49
    $region48: #{tpu_custom_call.1} parent=1 // pred_region
      %787 = vsyncadd [#allocation4], 0
      %s788 = sshll.u32 [#allocation10], 4
      %s789 = int_to_ptr.vmem [resolvable:$true] %s788
      %s790 = sshll.u32 %s7, 4
      %s791 = int_to_ptr.hbm [resolvable:$true] %s790
      %796 = dma.vmem_to_hbm [thread:$0]  %s789, 128, %s791, [#allocation4], 64, 64, 4
    $region49: #{tpu_custom_call.1} parent=1 // pred_fallthru
      _
    // Predicated region
    $region50: #{tpu_custom_call.1} parent=1 // pred_check
      _
    $region51: #{tpu_custom_call.1} parent=1 // pred_check_branch
      %798 = sbr.rel (0) target = $region53
    $region52: #{tpu_custom_call.1} parent=1 // pred_region
      %800 = dma.done [#allocation4], 128
    $region53: #{tpu_custom_call.1} parent=1 // pred_fallthru
      _
    %801 = vsyncpa [#allocation3], 1
    %802 = vsyncpa [#allocation6], 1
    %803 = vsyncpa [#allocation9], 1
    %804 = vsyncpa [#allocation4], 1

</llo_original>
